<compile_context>
chip_gen: v5e
topology: v5e:2x2
jax: 0.10.0
libtpu: 0.0.40
codegen_flags: <defaults>
</compile_context>

<pallas_src>
import functools

import jax
import jax.numpy as jnp
from jax.experimental import pallas as pl
from jax.experimental.pallas import tpu as pltpu

_LANE = 128


def _round_up(x, m):
    return ((x + m - 1) // m) * m


def _jaccard_kernel(pr_ref, gt_ref, acc_ref, *, total, block_rows,
                    steps_per_core, masked):
    """Accumulates [sum(pr*gt), sum(pr)+sum(gt)] into a (1,2,8,128) output block."""
    c = pl.program_id(0)   # TensorCore split ("parallel")
    i = pl.program_id(1)   # row-tile scan ("arbitrary")

    @pl.when(i == 0)
    def _init():
        acc_ref[...] = jnp.zeros_like(acc_ref)

    pr = jax.nn.sigmoid(pr_ref[...].astype(jnp.float32))
    gt = gt_ref[...].astype(jnp.float32)

    if masked:  # static: only emitted when the grid over-covers the tensor
        base = (c * steps_per_core + i) * (block_rows * _LANE)
        row = jax.lax.broadcasted_iota(jnp.int32, (block_rows, _LANE), 0)
        lane = jax.lax.broadcasted_iota(jnp.int32, (block_rows, _LANE), 1)
        keep = (base + row * _LANE + lane) < total
        pr = jnp.where(keep, pr, 0.0)
        gt = jnp.where(keep, gt, 0.0)

    groups = block_rows // 8
    inter_part = (pr * gt).reshape(groups, 8, _LANE).sum(axis=0)   # VPU adds only
    both_part = (pr + gt).reshape(groups, 8, _LANE).sum(axis=0)
    acc_ref[0, 0] += inter_part
    acc_ref[0, 1] += both_part


def jaccard_loss(y_pr, y_gt, *, eps=1e-7, activation="sigmoid", block_rows=2048):
    """Pallas implementation of JaccardLoss.forward (activation='sigmoid')."""
    if activation != "sigmoid":
        # TODO(synk): only the default 'sigmoid' activation is implemented.
        raise NotImplementedError(activation)

    total = y_pr.size
    pr_flat = jnp.ravel(y_pr)          # keep native dtype; cast happens in-kernel
    gt_flat = jnp.ravel(y_gt)

    rows = pl.cdiv(total, _LANE)
    pad = rows * _LANE - total
    if pad:
        # Only hit when numel % 128 != 0; pad value is irrelevant because the
        # in-kernel mask excludes every element index >= total.
        pr_flat = jnp.pad(pr_flat, (0, pad))
        gt_flat = jnp.pad(gt_flat, (0, pad))
    pr2 = pr_flat.reshape(rows, _LANE)
    gt2 = gt_flat.reshape(rows, _LANE)

    # Effective tile rows: multiple of 32 (safe sublane packing for f32/bf16/i8),
    # capped so small inputs don't allocate an oversized block.
    br = max(32, min(_round_up(block_rows, 32), _round_up(rows, 32)))
    nblocks = pl.cdiv(rows, br)
    spc = pl.cdiv(nblocks, 2)                 # grid steps per TensorCore
    covered = 2 * spc * br * _LANE
    masked = covered != total                 # static: tail / overflow blocks exist

    def in_map(c, i):
        # Clamp so overflow steps re-read a valid block (their contribution is
        # fully masked to zero inside the kernel).
        return (jnp.minimum(c * spc + i, nblocks - 1), 0)

    kernel = functools.partial(_jaccard_kernel, total=total, block_rows=br,
                               steps_per_core=spc, masked=masked)

    partials = pl.pallas_call(
        kernel,
        out_shape=jax.ShapeDtypeStruct((2, 2, 8, _LANE), jnp.float32),
        grid_spec=pltpu.PrefetchScalarGridSpec(
            num_scalar_prefetch=0,
            grid=(2, spc),
            in_specs=[
                pl.BlockSpec((br, _LANE), in_map),
                pl.BlockSpec((br, _LANE), in_map),
            ],
            # Block index is constant along the "arbitrary" axis -> the output
            # block stays resident in VMEM and acts as the accumulator.
            out_specs=pl.BlockSpec((1, 2, 8, _LANE), lambda c, i: (c, 0, 0, 0)),
        ),
        compiler_params=pltpu.CompilerParams(
            dimension_semantics=("parallel", "arbitrary")),
    )(pr2, gt2)

    # Tiny final reduction + eps math in plain JAX (2*8*128 elements per term).
    inter = jnp.sum(partials[:, 0])
    both = jnp.sum(partials[:, 1])            # sum(pr) + sum(gt)
    union = both - inter + eps
    return 1.0 - (inter + eps) / union


if __name__ == "__main__":
    key = jax.random.PRNGKey(0)
    k1, k2 = jax.random.split(key)
    # NCHW, like the PyTorch module would receive (logits + binary mask).
    y_pr = jax.random.normal(k1, (2, 4, 16, 16), dtype=jnp.float32)
    y_gt = (jax.random.uniform(k2, (2, 4, 16, 16)) > 0.5).astype(jnp.float32)

    loss = jax.jit(jaccard_loss)(y_pr, y_gt)
    loss = jax.block_until_ready(loss)

    # Pure-JAX reference of the PyTorch forward for a sanity check.
    pr = jax.nn.sigmoid(y_pr)
    inter = jnp.sum(pr * y_gt)
    union = jnp.sum(pr) + jnp.sum(y_gt) - inter + 1e-7
    ref = 1.0 - (inter + 1e-7) / union
    assert jnp.allclose(loss, ref, atol=1e-5, rtol=1e-5), (loss, ref)

    print("KERNEL_OK")
</pallas_src>

<mosaic_0001>
module attributes {stable_mosaic.version = 11 : i64} {
  func.func @_jaccard_kernel(%arg0: i32, %arg1: i32, %arg2: memref<32x128xf32, #tpu.memory_space<vmem>>, %arg3: memref<32x128xf32, #tpu.memory_space<vmem>>, %arg4: memref<1x2x8x128xf32, #tpu.memory_space<vmem>>) attributes {dimension_semantics = [#tpu.dimension_semantics<parallel>, #tpu.dimension_semantics<arbitrary>], iteration_bounds = array<i64: 2, 1>, scalar_prefetch = 0 : i64, scratch_operands = 0 : i64, tpu.core_type = #tpu.core_type<tc>, window_params = [{transform_indices = @transform_0, window_bounds = array<i64: 32, 128>}, {transform_indices = @transform_1, window_bounds = array<i64: 32, 128>}, {transform_indices = @transform_2, window_bounds = array<i64: 1, 2, 8, 128>}]} {
    %c0_i32 = arith.constant 0 : i32
    %0 = arith.cmpi eq, %arg1, %c0_i32 : i32
    %1 = arith.extui %0 : i1 to i32
    %c0_i32_0 = arith.constant 0 : i32
    %2 = arith.cmpi ne, %1, %c0_i32_0 : i32
    scf.if %2 {
      %cst_23 = arith.constant 0.000000e+00 : f32
      %44 = vector.broadcast %cst_23 : f32 to vector<1x2x8x128xf32>
      %c0_24 = arith.constant 0 : index
      %c0_25 = arith.constant 0 : index
      %c0_26 = arith.constant 0 : index
      %c0_27 = arith.constant 0 : index
      %45 = vector.load %arg4[%c0_24, %c0_25, %c0_26, %c0_27] : memref<1x2x8x128xf32, #tpu.memory_space<vmem>>, vector<1x2x8x128xf32>
      tpu.vector_store %arg4[%c0_24, %c0_25, %c0_26, %c0_27], %44 {strides = array<i32>} : memref<1x2x8x128xf32, #tpu.memory_space<vmem>>, vector<1x2x8x128xf32>,
    } else {
    }
    %c0 = arith.constant 0 : index
    %c0_1 = arith.constant 0 : index
    %3 = vector.load %arg2[%c0, %c0_1] : memref<32x128xf32, #tpu.memory_space<vmem>>, vector<32x128xf32>
    %4 = arith.negf %3 : vector<32x128xf32>
    %5 = math.exp %4 : vector<32x128xf32>
    %cst = arith.constant 1.000000e+00 : f32
    %6 = vector.broadcast %cst : f32 to vector<32x128xf32>
    %7 = arith.addf %6, %5 : vector<32x128xf32>
    %8 = arith.divf %6, %7 : vector<32x128xf32>
    %c0_2 = arith.constant 0 : index
    %c0_3 = arith.constant 0 : index
    %9 = vector.load %arg3[%c0_2, %c0_3] : memref<32x128xf32, #tpu.memory_space<vmem>>, vector<32x128xf32>
    %c1_i32 = arith.constant 1 : i32
    %10 = arith.muli %arg0, %c1_i32 : i32
    %11 = arith.addi %10, %arg1 : i32
    %c4096_i32 = arith.constant 4096 : i32
    %12 = arith.muli %11, %c4096_i32 : i32
    %13 = tpu.iota {dimensions = array<i32: 0>} : vector<32x128xi32>
    %14 = tpu.iota {dimensions = array<i32: 1>} : vector<32x128xi32>
    %c128_i32 = arith.constant 128 : i32
    %15 = vector.broadcast %c128_i32 : i32 to vector<32x128xi32>
    %16 = arith.muli %13, %15 : vector<32x128xi32>
    %17 = vector.broadcast %12 : i32 to vector<32x128xi32>
    %18 = arith.addi %17, %16 : vector<32x128xi32>
    %19 = arith.addi %18, %14 : vector<32x128xi32>
    %c2048_i32 = arith.constant 2048 : i32
    %20 = vector.broadcast %c2048_i32 : i32 to vector<32x128xi32>
    %21 = arith.cmpi slt, %19, %20 : vector<32x128xi32>
    %cst_4 = arith.constant 0.000000e+00 : f32
    %22 = vector.broadcast %cst_4 : f32 to vector<32x128xf32>
    %23 = arith.select %21, %8, %22 : vector<32x128xi1>, vector<32x128xf32>
    %cst_5 = arith.constant 0.000000e+00 : f32
    %24 = vector.broadcast %cst_5 : f32 to vector<32x128xf32>
    %25 = arith.select %21, %9, %24 : vector<32x128xi1>, vector<32x128xf32>
    %26 = arith.mulf %23, %25 : vector<32x128xf32>
    %27 = vector.shape_cast %26 : vector<32x128xf32> to vector<4x8x128xf32>
    %cst_6 = arith.constant dense<0.000000e+00> : vector<8x128xf32>
    %28 = vector.multi_reduction <add>, %27, %cst_6 [0] : vector<4x8x128xf32> to vector<8x128xf32>
    %29 = arith.addf %23, %25 : vector<32x128xf32>
    %30 = vector.shape_cast %29 : vector<32x128xf32> to vector<4x8x128xf32>
    %cst_7 = arith.constant dense<0.000000e+00> : vector<8x128xf32>
    %31 = vector.multi_reduction <add>, %30, %cst_7 [0] : vector<4x8x128xf32> to vector<8x128xf32>
    %c0_8 = arith.constant 0 : index
    %c0_9 = arith.constant 0 : index
    %c0_10 = arith.constant 0 : index
    %c0_11 = arith.constant 0 : index
    %32 = vector.load %arg4[%c0_8, %c0_9, %c0_10, %c0_11] : memref<1x2x8x128xf32, #tpu.memory_space<vmem>>, vector<1x1x8x128xf32>
    %33 = vector.shape_cast %32 : vector<1x1x8x128xf32> to vector<8x128xf32>
    %34 = arith.addf %33, %28 : vector<8x128xf32>
    %c0_12 = arith.constant 0 : index
    %c0_13 = arith.constant 0 : index
    %c0_14 = arith.constant 0 : index
    %c0_15 = arith.constant 0 : index
    %35 = vector.load %arg4[%c0_12, %c0_13, %c0_14, %c0_15] : memref<1x2x8x128xf32, #tpu.memory_space<vmem>>, vector<1x1x8x128xf32>
    %36 = vector.shape_cast %35 : vector<1x1x8x128xf32> to vector<8x128xf32>
    %37 = vector.shape_cast %34 : vector<8x128xf32> to vector<1x1x8x128xf32>
    tpu.vector_store %arg4[%c0_12, %c0_13, %c0_14, %c0_15], %37 {strides = array<i32>} : memref<1x2x8x128xf32, #tpu.memory_space<vmem>>, vector<1x1x8x128xf32>,
    %c0_16 = arith.constant 0 : index
    %c1 = arith.constant 1 : index
    %c0_17 = arith.constant 0 : index
    %c0_18 = arith.constant 0 : index
    %38 = vector.load %arg4[%c0_16, %c1, %c0_17, %c0_18] : memref<1x2x8x128xf32, #tpu.memory_space<vmem>>, vector<1x1x8x128xf32>
    %39 = vector.shape_cast %38 : vector<1x1x8x128xf32> to vector<8x128xf32>
    %40 = arith.addf %39, %31 : vector<8x128xf32>
    %c0_19 = arith.constant 0 : index
    %c1_20 = arith.constant 1 : index
    %c0_21 = arith.constant 0 : index
    %c0_22 = arith.constant 0 : index
    %41 = vector.load %arg4[%c0_19, %c1_20, %c0_21, %c0_22] : memref<1x2x8x128xf32, #tpu.memory_space<vmem>>, vector<1x1x8x128xf32>
    %42 = vector.shape_cast %41 : vector<1x1x8x128xf32> to vector<8x128xf32>
    %43 = vector.shape_cast %40 : vector<8x128xf32> to vector<1x1x8x128xf32>
    tpu.vector_store %arg4[%c0_19, %c1_20, %c0_21, %c0_22], %43 {strides = array<i32>} : memref<1x2x8x128xf32, #tpu.memory_space<vmem>>, vector<1x1x8x128xf32>,
    return
  }
  func.func @transform_0(%arg0: i32, %arg1: i32) -> (i32, i32) {
    %c1_i32 = arith.constant 1 : i32
    %0 = arith.muli %arg0, %c1_i32 : i32
    %1 = arith.addi %0, %arg1 : i32
    %c0_i32 = arith.constant 0 : i32
    %2 = arith.minsi %1, %c0_i32 : i32
    %c0_i32_0 = arith.constant 0 : i32
    %c0_i32_1 = arith.constant 0 : i32
    return %2, %c0_i32_0 : i32, i32
  }
  func.func @transform_1(%arg0: i32, %arg1: i32) -> (i32, i32) {
    %c1_i32 = arith.constant 1 : i32
    %0 = arith.muli %arg0, %c1_i32 : i32
    %1 = arith.addi %0, %arg1 : i32
    %c0_i32 = arith.constant 0 : i32
    %2 = arith.minsi %1, %c0_i32 : i32
    %c0_i32_0 = arith.constant 0 : i32
    %c0_i32_1 = arith.constant 0 : i32
    return %2, %c0_i32_0 : i32, i32
  }
  func.func @transform_2(%arg0: i32, %arg1: i32) -> (i32, i32, i32, i32) {
    %c0_i32 = arith.constant 0 : i32
    %c0_i32_0 = arith.constant 0 : i32
    %c0_i32_1 = arith.constant 0 : i32
    %c0_i32_2 = arith.constant 0 : i32
    return %arg0, %c0_i32, %c0_i32_0, %c0_i32_1 : i32, i32, i32, i32
  }
}

</mosaic_0001>

<llo_original>
// kernel: jaccard_loss.1
$region0: #{jaccard_loss.1}
  #allocation0 [shape = 'u32[]', space=smem, size = 0x4, offset = 0x4, fixed_abs, tag = 'smem constant byte address 0x4 - core index']
  #allocation1 [shape = 'u32[72,128]{1,0:T(1,128)}', space=vmem, size = 0x9000, scoped, tag = 'internal scratch']
  %s0 = inlined_call_operand.vmem [shape: f32[16,128], index: 0, kind: input, shape index: {}]
  %s1 = inlined_call_operand.vmem [shape: f32[16,128], index: 1, kind: input, shape index: {}]
  %s2 = inlined_call_operand.vmem [shape: f32[2,2,8,128], index: 2, kind: output, shape index: {}]
  %s3 = sld [smem:[#allocation0]]
  $region45: #{jaccard_loss.1} parent=0
    _
  %s5 = ssub.s32 1, %s3
  %s6 = scalar_select 0, %s5, %s3
  loop: start=0, step=1, limit=4
  $region2: #{jaccard_loss.1} parent=0 // loop_pre_header
    _
  $region3: #{jaccard_loss.1} parent=0 // loop_header
    %s8 = sphi 0, %s12
    %p9 = scmp.ge.s32.totalorder %s8, 4
    %s15 = sphi 0, %s27
    %s16 = sphi 0, %s23
    %s17 = sphi 0, %s15
    %s18 = sphi 0, %s16
    %s19 = sphi 0, %s17
    %s20 = sphi 0, %s18
    %s36 = sphi 0, %s38
    %s39 = sphi 0, %s36
    %s40 = sphi 0, %s39
    %s56 = sphi 0, %s40
    %s68 = sphi 0, %s70
    %s71 = sphi 0, %s68
    %s72 = sphi 0, %s71
    %s88 = sphi 0, %s72
    %s94 = sphi 0, %s96
    %s97 = sphi 0, %s94
    %s98 = sphi 0, %s97
    %s114 = sphi 0, %s98
  $region4: #{jaccard_loss.1} parent=0 // loop_header_branch
    %11 = sbr.rel (%p9) target = $region8
  $region5: #{jaccard_loss.1} parent=0 // loop_body
    %s13 = ssub.s32 %s8, 1
    %s14 = ssub.s32 %s8, 2
    %s21 = sadd.s32 1, %s16
    %p22 = scmp.ge.s32.totalorder %s21, 1
    %s23 = scalar_select %p22, 0, %s21
    %s24 = sadd.s32 1, %s15
    %s25 = scalar_select %p22, %s24, %s15
    %p26 = scmp.ge.s32.totalorder %s25, 2
    %s27 = scalar_select %p26, 0, %s25
    %s28 = sadd.s32 %s15, %s16
    %p29 = scmp.lt.s32.totalorder %s28, 0
    %s30 = scalar_select %p29, %s28, 0
    %s31 = sadd.s32 %s27, %s23
    %p32 = scmp.lt.s32.totalorder %s31, 0
    %s33 = scalar_select %p32, %s31, 0
    %s34 = ssub.s32 %s30, %s33
    %p35 = scmp.eq.s32.totalorder %s34, 0
    %s37 = sadd.s32 %s36, 1
    %s38 = scalar_select %p35, %s36, %s37
    %p41 = pneg %p35
    %p42 = scmp.eq.s32.totalorder %s8, 1
    %p43 = por %p41, %p42
    %p44 = scmp.ne.s32.totalorder %s36, %s39
    %p45 = scmp.eq.s32.totalorder %s8, 0
    %p46 = por %p44, %p45
    %p47 = scmp.ne.s32.totalorder %s36, %s39
    %p48 = scmp.eq.s32.totalorder %s13, 1
    %p49 = por %p47, %p48
    %p50 = scmp.ne.s32.totalorder %s39, %s40
    %p51 = scmp.eq.s32.totalorder %s13, 0
    %p52 = por %p50, %p51
    %p53 = scmp.ne.s32.totalorder %s39, %s40
    %p54 = scmp.eq.s32.totalorder %s14, 1
    %p55 = por %p53, %p54
    %p57 = scmp.ne.s32.totalorder %s40, %s56
    %p58 = scmp.eq.s32.totalorder %s14, 0
    %p59 = por %p57, %p58
    %s60 = sadd.s32 %s15, %s16
    %p61 = scmp.lt.s32.totalorder %s60, 0
    %s62 = scalar_select %p61, %s60, 0
    %s63 = sadd.s32 %s27, %s23
    %p64 = scmp.lt.s32.totalorder %s63, 0
    %s65 = scalar_select %p64, %s63, 0
    %s66 = ssub.s32 %s62, %s65
    %p67 = scmp.eq.s32.totalorder %s66, 0
    %s69 = sadd.s32 %s68, 1
    %s70 = scalar_select %p67, %s68, %s69
    %p73 = pneg %p67
    %p74 = scmp.eq.s32.totalorder %s8, 1
    %p75 = por %p73, %p74
    %p76 = scmp.ne.s32.totalorder %s68, %s71
    %p77 = scmp.eq.s32.totalorder %s8, 0
    %p78 = por %p76, %p77
    %p79 = scmp.ne.s32.totalorder %s68, %s71
    %p80 = scmp.eq.s32.totalorder %s13, 1
    %p81 = por %p79, %p80
    %p82 = scmp.ne.s32.totalorder %s71, %s72
    %p83 = scmp.eq.s32.totalorder %s13, 0
    %p84 = por %p82, %p83
    %p85 = scmp.ne.s32.totalorder %s71, %s72
    %p86 = scmp.eq.s32.totalorder %s14, 1
    %p87 = por %p85, %p86
    %p89 = scmp.ne.s32.totalorder %s72, %s88
    %p90 = scmp.eq.s32.totalorder %s14, 0
    %p91 = por %p89, %p90
    %s92 = ssub.s32 %s15, %s27
    %p93 = scmp.eq.s32.totalorder %s92, 0
    %s95 = sadd.s32 %s94, 1
    %s96 = scalar_select %p93, %s94, %s95
    %p99 = pneg %p93
    %p100 = scmp.eq.s32.totalorder %s8, 1
    %p101 = por %p99, %p100
    %p102 = scmp.ne.s32.totalorder %s94, %s97
    %p103 = scmp.eq.s32.totalorder %s8, 0
    %p104 = por %p102, %p103
    %p105 = scmp.ne.s32.totalorder %s94, %s97
    %p106 = scmp.eq.s32.totalorder %s13, 1
    %p107 = por %p105, %p106
    %p108 = scmp.ne.s32.totalorder %s97, %s98
    %p109 = scmp.eq.s32.totalorder %s13, 0
    %p110 = por %p108, %p109
    %p111 = scmp.ne.s32.totalorder %s97, %s98
    %p112 = scmp.eq.s32.totalorder %s14, 1
    %p113 = por %p111, %p112
    %p115 = scmp.ne.s32.totalorder %s98, %s114
    %p116 = scmp.eq.s32.totalorder %s14, 0
    %p117 = por %p115, %p116
    %p118 = scmp.le.s32.totalorder 1, %s8
    %p119 = scmp.lt.s32.totalorder %s8, 3
    %p120 = pnand %p118, %p119
    %p121 = pneg %p120
    // Predicated region
    $region9: #{jaccard_loss.1} parent=5 // pred_check
      _
    $region10: #{jaccard_loss.1} parent=5 // pred_check_branch
      %123 = sbr.rel (%p120) target = $region12
    $region11: #{jaccard_loss.1} parent=5 // pred_region
      %s124 = ssub.s32 %s8, 1
    $region12: #{jaccard_loss.1} parent=5 // pred_fallthru
      _
    %p125 = scmp.lt.s32.totalorder %s8, 2
    // Predicated region
    $region13: #{jaccard_loss.1} parent=5 // pred_check
      %p126 = pneg %p125
    $region14: #{jaccard_loss.1} parent=5 // pred_check_branch
      %128 = sbr.rel (%p126) target = $region16
    $region15: #{jaccard_loss.1} parent=5 // pred_region
      // Predicated region
      $region17: #{jaccard_loss.1} parent=15 // pred_check
        %p129 = pneg %p46
      $region18: #{jaccard_loss.1} parent=15 // pred_check_branch
        %131 = sbr.rel (%p129) target = $region20
      $region19: #{jaccard_loss.1} parent=15 // pred_region
        %s132 = sadd.s32 %s15, %s16
        %p133 = scmp.lt.s32.totalorder %s132, 0
        %s134 = scalar_select %p133, %s132, 0
        %s135 = smul.u32 4, %s134
        %s136 = ssub.s32 2, %s135
        %s137 = smul.u32 8, %s136
        %p138 = scmp.lt.s32.totalorder %s135, 1
        %s139 = scalar_select %p138, %s135, 1
        %s140 = smul.addr %s139, 8
        %s141 = scalar_lea.vmem %s0, %s140
        %s142 = sadd.s32 %s15, %s16
        %p143 = scmp.lt.s32.totalorder %s142, 0
        %s144 = scalar_select %p143, %s142, 0
        %s145 = smul.u32 4, %s144
        %s146 = ssub.s32 2, %s145
        %s147 = smul.u32 8, %s146
      $region20: #{jaccard_loss.1} parent=15 // pred_fallthru
        _
      // Predicated region
      $region21: #{jaccard_loss.1} parent=15 // pred_check
        %p148 = pneg %p78
      $region22: #{jaccard_loss.1} parent=15 // pred_check_branch
        %150 = sbr.rel (%p148) target = $region24
      $region23: #{jaccard_loss.1} parent=15 // pred_region
        %s151 = sadd.s32 %s15, %s16
        %p152 = scmp.lt.s32.totalorder %s151, 0
        %s153 = scalar_select %p152, %s151, 0
        %s154 = smul.u32 4, %s153
        %s155 = ssub.s32 2, %s154
        %s156 = smul.u32 8, %s155
        %p157 = scmp.lt.s32.totalorder %s154, 1
        %s158 = scalar_select %p157, %s154, 1
        %s159 = smul.addr %s158, 8
        %s160 = scalar_lea.vmem %s1, %s159
        %s161 = sadd.s32 %s15, %s16
        %p162 = scmp.lt.s32.totalorder %s161, 0
        %s163 = scalar_select %p162, %s161, 0
        %s164 = smul.u32 4, %s163
        %s165 = ssub.s32 2, %s164
        %s166 = smul.u32 8, %s165
      $region24: #{jaccard_loss.1} parent=15 // pred_fallthru
        _
    $region16: #{jaccard_loss.1} parent=5 // pred_fallthru
      _
    %p167 = scmp.le.s32.totalorder 1, %s8
    %p168 = scmp.lt.s32.totalorder %s8, 3
    %p169 = pnand %p167, %p168
    %p170 = pneg %p169
    // Predicated region
    $region25: #{jaccard_loss.1} parent=5 // pred_check
      _
    $region26: #{jaccard_loss.1} parent=5 // pred_check_branch
      %172 = sbr.rel (%p169) target = $region28
    $region27: #{jaccard_loss.1} parent=5 // pred_region
      %s173 = ssub.s32 %s8, 1
      %s174 = sadd.s32 %s17, %s18
      %p175 = scmp.lt.s32.totalorder %s174, 0
      %s176 = scalar_select %p175, %s174, 0
      %s177 = smul.u32 4, %s176
      %s178 = ssub.s32 2, %s177
      %s179 = smul.u32 8, %s178
      %p180 = scmp.lt.s32.totalorder %s177, 1
      %s181 = scalar_select %p180, %s177, 1
      %s182 = smul.addr %s181, 8
      %s183 = scalar_lea.vmem %s0, %s182
      %p184 = pneg %p52
      %p185 = pneg %p49
      %s186 = sadd.s32 %s17, %s18
      %p187 = scmp.lt.s32.totalorder %s186, 0
      %s188 = scalar_select %p187, %s186, 0
      %s189 = smul.u32 4, %s188
      %s190 = ssub.s32 2, %s189
      %s191 = smul.u32 8, %s190
      %p192 = scmp.lt.s32.totalorder %s189, 1
      %s193 = scalar_select %p192, %s189, 1
      %s194 = smul.addr %s193, 8
      %s195 = scalar_lea.vmem %s1, %s194
      %p196 = pneg %p84
      %p197 = pneg %p81
      %p198 = pneg %p110
      %p199 = pneg %p107
      %p200 = scmp.lt.s32.totalorder %s17, 1
      %s201 = scalar_select %p200, %s17, 1
      %s202 = smul.addr %s201, 2
      %s203 = smul.addr %s202, 8
      %s204 = scalar_lea.vmem %s2, %s203
      %s205 = sadd.s32 %s17, %s18
      %p206 = scmp.lt.s32.totalorder %s205, 0
      %s207 = scalar_select %p206, %s205, 0
      %s208 = smul.u32 4, %s207
      %s209 = ssub.s32 2, %s208
      %s210 = smul.u32 8, %s209
      %p211 = scmp.lt.s32.totalorder %s208, 1
      %s212 = scalar_select %p211, %s208, 1
      %s213 = smul.addr %s212, 8
      %s214 = scalar_lea.vmem %s0, %s213
      %s215 = sadd.s32 %s17, %s18
      %p216 = scmp.lt.s32.totalorder %s215, 0
      %s217 = scalar_select %p216, %s215, 0
      %s218 = smul.u32 4, %s217
      %s219 = ssub.s32 2, %s218
      %s220 = smul.u32 8, %s219
      %s221 = sadd.s32 %s17, %s18
      %p222 = scmp.lt.s32.totalorder %s221, 0
      %s223 = scalar_select %p222, %s221, 0
      %s224 = smul.u32 4, %s223
      %s225 = ssub.s32 2, %s224
      %s226 = smul.u32 8, %s225
      %p227 = scmp.lt.s32.totalorder %s224, 1
      %s228 = scalar_select %p227, %s224, 1
      %s229 = smul.addr %s228, 8
      %s230 = scalar_lea.vmem %s1, %s229
      %s231 = sadd.s32 %s17, %s18
      %p232 = scmp.lt.s32.totalorder %s231, 0
      %s233 = scalar_select %p232, %s231, 0
      %s234 = smul.u32 4, %s233
      %s235 = ssub.s32 2, %s234
      %s236 = smul.u32 8, %s235
      %p237 = scmp.lt.s32.totalorder %s17, 1
      %s238 = scalar_select %p237, %s17, 1
      %s239 = smul.addr %s238, 2
      %s240 = smul.addr %s239, 8
      %s241 = scalar_lea.vmem %s2, %s240
      %p242 = scmp.eq.s32.totalorder %s18, 0
      // Predicated region
      $region29: #{jaccard_loss.1} parent=27 // pred_check
        %p243 = pneg %p242
      $region30: #{jaccard_loss.1} parent=27 // pred_check_branch
        %245 = sbr.rel (%p243) target = $region32
      $region31: #{jaccard_loss.1} parent=27 // pred_region
        %246 = vst [vmem:[%s241] sm:$0xff] 0.0
        %247 = vst [vmem:[%s241 + $0x8] sm:$0xff] 0.0
      $region32: #{jaccard_loss.1} parent=27 // pred_fallthru
        _
      %v248 = vld [vmem:[%s214] sm:$0xff]
      %v249 = vld [vmem:[%s214 + $0x8] sm:$0xff]
      %v250 = vld [vmem:[%s214 + $0x10] sm:$0xff]
      %v251 = vld [vmem:[%s214 + $0x18] sm:$0xff]
      %v252 = vxor.u32 %v248, 2147483648
      %v253 = vxor.u32 %v249, 2147483648
      %v254 = vxor.u32 %v250, 2147483648
      %v255 = vxor.u32 %v251, 2147483648
      %v256 = vmul.f32 %v252, 1.442695
      %v257 = vpow.pop %v256
      %v258 = vmul.f32 %v253, 1.442695
      %v259 = vpow.pop %v258
      %v260 = vmul.f32 %v254, 1.442695
      %v261 = vpow.pop %v260
      %v262 = vmul.f32 %v255, 1.442695
      %v263 = vpow.pop %v262
      %v264 = vadd.f32 %v257, 1.0
      %v265 = vadd.f32 %v259, 1.0
      %v266 = vadd.f32 %v261, 1.0
      %v267 = vadd.f32 %v263, 1.0
      %v268 = vrcp.pop %v264
      %v269 = vmul.f32 %v264, %v268
      %v270 = vsub.f32 1.0, %v269
      %v271 = vmul.f32 %v268, %v270
      %v272 = vadd.f32 %v268, %v271
      %vm273 = vweird.f32 %v264
      %vm274 = vweird.f32 %v268
      %vm275 = vmor %vm273, %vm274
      %v276 = vsel %vm275, %v268, %v272
      %v277 = vand.u32 2147483647, %v264
      %vm278 = vcmp.eq.f32.partialorder %v277, 8.507059e+37
      %v279 = vand.u32 %v264, 2147483648
      %v280 = vor.u32 1.1754944e-38, %v279
      %v281 = vsel %vm278, %v280, %v276
      %v282 = vmul.f32 1.0, %v281
      %v283 = vrcp.pop %v265
      %v284 = vmul.f32 %v265, %v283
      %v285 = vsub.f32 1.0, %v284
      %v286 = vmul.f32 %v283, %v285
      %v287 = vadd.f32 %v283, %v286
      %vm288 = vweird.f32 %v265
      %vm289 = vweird.f32 %v283
      %vm290 = vmor %vm288, %vm289
      %v291 = vsel %vm290, %v283, %v287
      %v292 = vand.u32 2147483647, %v265
      %vm293 = vcmp.eq.f32.partialorder %v292, 8.507059e+37
      %v294 = vand.u32 %v265, 2147483648
      %v295 = vor.u32 1.1754944e-38, %v294
      %v296 = vsel %vm293, %v295, %v291
      %v297 = vmul.f32 1.0, %v296
      %v298 = vrcp.pop %v266
      %v299 = vmul.f32 %v266, %v298
      %v300 = vsub.f32 1.0, %v299
      %v301 = vmul.f32 %v298, %v300
      %v302 = vadd.f32 %v298, %v301
      %vm303 = vweird.f32 %v266
      %vm304 = vweird.f32 %v298
      %vm305 = vmor %vm303, %vm304
      %v306 = vsel %vm305, %v298, %v302
      %v307 = vand.u32 2147483647, %v266
      %vm308 = vcmp.eq.f32.partialorder %v307, 8.507059e+37
      %v309 = vand.u32 %v266, 2147483648
      %v310 = vor.u32 1.1754944e-38, %v309
      %v311 = vsel %vm308, %v310, %v306
      %v312 = vmul.f32 1.0, %v311
      %v313 = vrcp.pop %v267
      %v314 = vmul.f32 %v267, %v313
      %v315 = vsub.f32 1.0, %v314
      %v316 = vmul.f32 %v313, %v315
      %v317 = vadd.f32 %v313, %v316
      %vm318 = vweird.f32 %v267
      %vm319 = vweird.f32 %v313
      %vm320 = vmor %vm318, %vm319
      %v321 = vsel %vm320, %v313, %v317
      %v322 = vand.u32 2147483647, %v267
      %vm323 = vcmp.eq.f32.partialorder %v322, 8.507059e+37
      %v324 = vand.u32 %v267, 2147483648
      %v325 = vor.u32 1.1754944e-38, %v324
      %v326 = vsel %vm323, %v325, %v321
      %v327 = vmul.f32 1.0, %v326
      %v328 = vld [vmem:[%s230] sm:$0xff]
      %v329 = vld [vmem:[%s230 + $0x8] sm:$0xff]
      %v330 = vld [vmem:[%s230 + $0x10] sm:$0xff]
      %v331 = vld [vmem:[%s230 + $0x18] sm:$0xff]
      %s332 = sadd.s32 %s17, %s18
      %s333 = smul.u32 %s332, 4096
      %v334 = vlaneseq
      %v335 = vshrl.u32 %v334, 7
      %v336 = vadd.s32 %v335, 8
      %v337 = vadd.s32 %v335, 16
      %v338 = vadd.s32 %v335, 24
      %v339 = vlaneseq
      %v340 = vand.u32 %v339, 127
      %v341 = vmul.u32 %v335, 128
      %v342 = vmul.u32 %v336, 128
      %v343 = vmul.u32 %v337, 128
      %v344 = vmul.u32 %v338, 128
      %v345 = vstv %s333
      %v346 = vadd.s32 %v345, %v341
      %v347 = vadd.s32 %v345, %v342
      %v348 = vadd.s32 %v345, %v343
      %v349 = vadd.s32 %v345, %v344
      %v350 = vadd.s32 %v346, %v340
      %v351 = vadd.s32 %v347, %v340
      %v352 = vadd.s32 %v348, %v340
      %v353 = vadd.s32 %v349, %v340
      %vm354 = vcmp.lt.s32.totalorder %v350, 2048
      %vm355 = vcmp.lt.s32.totalorder %v351, 2048
      %vm356 = vcmp.lt.s32.totalorder %v352, 2048
      %vm357 = vcmp.lt.s32.totalorder %v353, 2048
      %v358 = vsel %vm354, %v282, 0.0
      %v359 = vsel %vm355, %v297, 0.0
      %v360 = vsel %vm356, %v312, 0.0
      %v361 = vsel %vm357, %v327, 0.0
      %v362 = vsel %vm354, %v328, 0.0
      %v363 = vsel %vm355, %v329, 0.0
      %v364 = vsel %vm356, %v330, 0.0
      %v365 = vsel %vm357, %v331, 0.0
      %v366 = vmul.f32 %v358, %v362
      %v367 = vmul.f32 %v359, %v363
      %v368 = vmul.f32 %v360, %v364
      %v369 = vmul.f32 %v361, %v365
      %v370 = vadd.f32 %v366, %v367
      %v371 = vadd.f32 %v370, %v368
      %v372 = vadd.f32 %v371, %v369
      %v373 = vadd.f32 %v358, %v362
      %v374 = vadd.f32 %v359, %v363
      %v375 = vadd.f32 %v360, %v364
      %v376 = vadd.f32 %v361, %v365
      %v377 = vadd.f32 %v373, %v374
      %v378 = vadd.f32 %v377, %v375
      %v379 = vadd.f32 %v378, %v376
      %v380 = vld [vmem:[%s241] sm:$0xff]
      %v381 = vadd.f32 %v380, %v372
      %382 = vst [vmem:[%s241] sm:$0xff] %v381
      %s383 = scalar_lea.vmem %s241, 8
      %v384 = vld [vmem:[%s383] sm:$0xff]
      %v385 = vadd.f32 %v384, %v379
      %386 = vst [vmem:[%s383] sm:$0xff] %v385
      %p387 = scmp.lt.s32.totalorder %s17, 1
      %s388 = scalar_select %p387, %s17, 1
      %s389 = smul.addr %s388, 2
      %s390 = smul.addr %s389, 8
      %s391 = scalar_lea.vmem %s2, %s390
      // Predicated region
      $region33: #{jaccard_loss.1} parent=27 // pred_check
        %p392 = pneg %p107
      $region34: #{jaccard_loss.1} parent=27 // pred_check_branch
        %394 = sbr.rel (%p392) target = $region36
      $region35: #{jaccard_loss.1} parent=27 // pred_region
        _
      $region36: #{jaccard_loss.1} parent=27 // pred_fallthru
        _
    $region28: #{jaccard_loss.1} parent=5 // pred_fallthru
      _
    %p395 = scmp.le.s32.totalorder 2, %s8
    // Predicated region
    $region37: #{jaccard_loss.1} parent=5 // pred_check
      %p396 = pneg %p395
    $region38: #{jaccard_loss.1} parent=5 // pred_check_branch
      %398 = sbr.rel (%p396) target = $region40
    $region39: #{jaccard_loss.1} parent=5 // pred_region
      %s399 = ssub.s32 %s8, 2
      // Predicated region
      $region41: #{jaccard_loss.1} parent=39 // pred_check
        %p400 = pneg %p113
      $region42: #{jaccard_loss.1} parent=39 // pred_check_branch
        %402 = sbr.rel (%p400) target = $region44
      $region43: #{jaccard_loss.1} parent=39 // pred_region
        %p403 = scmp.lt.s32.totalorder %s19, 1
        %s404 = scalar_select %p403, %s19, 1
        %s405 = smul.addr %s404, 2
        %s406 = smul.addr %s405, 8
        %s407 = scalar_lea.vmem %s2, %s406
      $region44: #{jaccard_loss.1} parent=39 // pred_fallthru
        _
    $region40: #{jaccard_loss.1} parent=5 // pred_fallthru
      _
  $region6: #{jaccard_loss.1} parent=0 // loop_footer
    %s12 = sadd.s32 1, %s8
  $region7: #{jaccard_loss.1} parent=0 // loop_footer_branch
    %7 = sbr.rel target = $region3
  $region8: #{jaccard_loss.1} parent=0 // loop_exit
    _

</llo_original>
